<compile_context>
chip_gen: v5e
topology: v5e:2x2
jax: 0.10.0
libtpu: 0.0.40
codegen_flags: <defaults>
</compile_context>

<pallas_src>
import jax
import jax.numpy as jnp
from jax import lax
from jax.experimental import pallas as pl
from jax.experimental.pallas import tpu as pltpu


def _round_up(n, m):
    return ((n + m - 1) // m) * m


def _vmem_limit_bytes():
    """Per-generation scoped-VMEM request (conservative when unknown/interpret)."""
    try:
        kind = jax.devices()[0].device_kind.lower()
    except Exception:
        kind = ""
    if "v7" in kind:
        return 44 * 1024 * 1024      # 64 MiB physical per TC -> leave headroom
    if "tpu" in kind:
        return 64 * 1024 * 1024      # v5e/v6e: 128 MiB physical VMEM
    return 32 * 1024 * 1024          # unknown backend / interpret mode


def _choose_batch_tile(B, input_dim, hidden_sizes, x_itemsize, resident_bytes,
                       vmem_limit, block_b):
    """Largest 128-multiple batch tile fitting the VMEM budget (>=2 tiles if B allows)."""
    # Per-batch-column VMEM cost: double-buffered x tile + f32 activations + (1, tb) out.
    per_col = 2 * input_dim * x_itemsize + sum(h * 4 for h in hidden_sizes) + 2 * 4
    avail = int(vmem_limit * 0.75) - 2 * resident_bytes     # resident weights (2x-buffered)
    tb = max(128, (max(avail, 0) // max(per_col, 1)) // 128 * 128)
    tb = min(tb, max(128, block_b // 128 * 128))            # caller cap, lane-aligned
    tb = min(tb, _round_up(B, 128))                         # never exceed padded batch
    tb = min(tb, max(128, _round_up(-(-B // 2), 128)))      # >=2 tiles -> both v7x TCs
    return tb


def _make_mlp_kernel(num_hidden, use_sigmoid, compute_dtype):
    """Fused feature-major MLP kernel.

    Ref order: x, (W, b) per hidden layer, w_last, b_last, out.
      x      : (TB, input_dim)   native layout, batch tile on the sublane axis
      W      : (out_l, in_l)     compute dtype, VMEM-resident
      b      : (out_l, 1)        f32
      w_last : (hidden_last, 1)  f32 column   ((1, input_dim) f32 row if no hidden layers)
      b_last : (1, 1)            f32
      out    : (1, TB)           lane-dense f32 store
    """
    contract_dim1 = (((1,), (1,)), ((), ()))   # contract dim 1 of lhs with dim 1 of rhs

    def kernel(*refs):
        x_ref = refs[0]
        o_ref = refs[-1]
        idx = 1
        if num_hidden == 0:
            w_last = refs[idx][...]              # (1, input_dim) f32 row
            b_last = refs[idx + 1][...]          # (1, 1)
            y = lax.dot_general(w_last, x_ref[...].astype(jnp.float32),
                                contract_dim1,
                                preferred_element_type=jnp.float32) + b_last
        else:
            # First layer: (h1, in) x (TB, in) -> (h1, TB); x stays in native layout,
            # the transpose is folded into the MXU operand feed (no wrapper HBM pass).
            w0, b0 = refs[idx][...], refs[idx + 1][...]
            idx += 2
            h = lax.dot_general(w0, x_ref[...], contract_dim1,
                                preferred_element_type=jnp.float32) + b0
            h = jnp.maximum(h, 0.0)
            # NOTE: for large hidden layers, pad layer widths to 256 (v6e/v7x) /
            # 128 (v5e) multiples in the wrapper to avoid partial MXU passes.
            for _ in range(1, num_hidden):
                w_ref, b_ref = refs[idx], refs[idx + 1]
                idx += 2
                # Feed the MXU in the weights' dtype; accumulate + bias/ReLU in f32.
                h = jnp.dot(w_ref[...], h.astype(compute_dtype),
                            preferred_element_type=jnp.float32) + b_ref[...]
                h = jnp.maximum(h, 0.0)
            # Final Linear(hidden -> 1): broadcast-multiply + sublane reduce (VPU/XLU)
            # instead of wasting a full MXU pass on a single output column.
            w_last = refs[idx][...]              # (hidden_last, 1) f32
            b_last = refs[idx + 1][...]          # (1, 1) f32
            y = jnp.sum(h * w_last, axis=0, keepdims=True) + b_last  # (1, TB)
        if use_sigmoid:
            # exp + exact reciprocal both land on the EUP; approx=False keeps the
            # result within float rounding of the reference (approx=True was ~1.5e-3 off).
            y = pl.reciprocal(1.0 + jnp.exp(-y), approx=False)
        o_ref[...] = y.astype(o_ref.dtype)

    return kernel


def nnet_forward(x, params, use_sigmoid=True, *, block_b=4096,
                 compute_dtype=jnp.float32):
    """Fused MLP forward.

    x:      (B, input_dim) float array.
    params: list of (W, b) with W in PyTorch nn.Linear layout (out, in) and b of
            shape (out,). Last layer must have out == 1.
    Returns (B, 1) float32.

    compute_dtype=jnp.bfloat16 runs the matmuls with native-MXU bf16 operands
    (f32 accumulation); feed x already in bf16 upstream to also halve its HBM stream.
    """
    B, input_dim = x.shape
    num_hidden = len(params) - 1
    hidden_sizes = [w.shape[0] for w, _ in params[:-1]]

    # One-time operand casts in the wrapper (NOT per grid step inside the kernel).
    if x.dtype != compute_dtype:
        x = x.astype(compute_dtype)
    hidden_params = []
    resident_bytes = 0
    for w, b in params[:-1]:
        w_c = w.astype(compute_dtype)
        b_col = b.reshape(-1, 1).astype(jnp.float32)
        hidden_params.append((w_c, b_col))
        resident_bytes += w_c.size * w_c.dtype.itemsize + b_col.size * 4
    w_last, b_last = params[-1]
    if num_hidden == 0:
        w_last_arr = w_last.reshape(1, -1).astype(jnp.float32)   # (1, input_dim) row
    else:
        w_last_arr = w_last.reshape(-1, 1).astype(jnp.float32)   # (hidden_last, 1) col
    b_last_arr = b_last.reshape(1, 1).astype(jnp.float32)
    resident_bytes += w_last_arr.size * 4 + 4
    # TODO(synk): weights larger than a few MiB should be tiled over the contraction
    # dim instead of being kept fully VMEM-resident.

    vmem_limit = _vmem_limit_bytes()
    tb = _choose_batch_tile(B, input_dim, hidden_sizes, x.dtype.itemsize,
                            resident_bytes, vmem_limit, block_b)
    b_pad = _round_up(B, tb)
    grid = (b_pad // tb,)

    if b_pad != B:
        x = jnp.pad(x, ((0, b_pad - B), (0, 0)))   # pad only the ragged batch tail

    flat_args = [x]
    in_specs = [pl.BlockSpec((tb, input_dim), lambda i: (i, 0))]
    for w_c, b_col in hidden_params:
        flat_args += [w_c, b_col]
        in_specs += [
            pl.BlockSpec(w_c.shape, lambda i: (0, 0)),     # VMEM-resident
            pl.BlockSpec(b_col.shape, lambda i: (0, 0)),   # VMEM-resident
        ]
    flat_args += [w_last_arr, b_last_arr]
    in_specs += [
        pl.BlockSpec(w_last_arr.shape, lambda i: (0, 0)),
        pl.BlockSpec(b_last_arr.shape, lambda i: (0, 0)),
    ]

    out_t = pl.pallas_call(
        _make_mlp_kernel(num_hidden, use_sigmoid, compute_dtype),
        out_shape=jax.ShapeDtypeStruct((1, b_pad), jnp.float32),
        grid=grid,
        in_specs=in_specs,
        out_specs=pl.BlockSpec((1, tb), lambda i: (0, i)),
        compiler_params=pltpu.CompilerParams(
            dimension_semantics=("parallel",),   # shard batch tiles across TCs (v7x)
            vmem_limit_bytes=vmem_limit,
        ),
    )(*flat_args)

    return out_t[:, :B].T  # (B, 1)


def init_params(key, input_dim, hidden_layer_sizes):
    """Deterministic PyTorch-style init. Weights stored as (out, in)."""
    sizes = [input_dim] + list(hidden_layer_sizes) + [1]
    params = []
    for fan_in, fan_out in zip(sizes[:-1], sizes[1:]):
        kw, kb, key = jax.random.split(key, 3)
        bound = 1.0 / jnp.sqrt(fan_in)
        w = jax.random.uniform(kw, (fan_out, fan_in), jnp.float32, -bound, bound)
        b = jax.random.uniform(kb, (fan_out,), jnp.float32, -bound, bound)
        params.append((w, b))
    return params


if __name__ == "__main__":
    key = jax.random.PRNGKey(0)
    kx, kp = jax.random.split(key)

    batch = 8
    input_dim = 16
    hidden_layer_sizes = [32, 32]

    x = jax.random.normal(kx, (batch, input_dim), dtype=jnp.float32)
    params = init_params(kp, input_dim, hidden_layer_sizes)

    out = nnet_forward(x, params, use_sigmoid=True)
    out = jax.block_until_ready(out)

    # sanity check vs. pure-JAX reference of the same forward (x @ W.T + b)
    h = x
    for w, b in params[:-1]:
        h = jnp.maximum(h @ w.T + b, 0.0)
    ref = h @ params[-1][0].T + params[-1][1]
    ref = 1.0 / (1.0 + jnp.exp(-ref))

    assert out.shape == (batch, 1)
    max_err = float(jnp.max(jnp.abs(out - ref)))
    assert max_err < 1e-3, f"mismatch vs reference: max abs err = {max_err}"

    # bf16-operand path (native MXU format); must stay close to the f32 result.
    out_bf16 = jax.block_until_ready(
        nnet_forward(x, params, use_sigmoid=True, compute_dtype=jnp.bfloat16))
    bf16_err = float(jnp.max(jnp.abs(out_bf16 - out)))
    assert bf16_err < 5e-2, f"bf16 path drifted: max abs err = {bf16_err}"

    print("KERNEL_OK")
</pallas_src>

<mosaic_0001>
module attributes {stable_mosaic.version = 11 : i64} {
  func.func @kernel(%arg0: i32, %arg1: memref<128x16xf32, #tpu.memory_space<vmem>>, %arg2: memref<32x16xf32, #tpu.memory_space<vmem>>, %arg3: memref<32x1xf32, #tpu.memory_space<vmem>>, %arg4: memref<32x32xf32, #tpu.memory_space<vmem>>, %arg5: memref<32x1xf32, #tpu.memory_space<vmem>>, %arg6: memref<32x1xf32, #tpu.memory_space<vmem>>, %arg7: memref<1x1xf32, #tpu.memory_space<vmem>>, %arg8: memref<1x128xf32, #tpu.memory_space<vmem>>) attributes {dimension_semantics = [#tpu.dimension_semantics<parallel>], iteration_bounds = array<i64: 1>, scalar_prefetch = 0 : i64, scratch_operands = 0 : i64, tpu.core_type = #tpu.core_type<tc>, window_params = [{transform_indices = @transform_0, window_bounds = array<i64: 128, 16>}, {pipeline_mode = #tpu.pipeline_mode<synchronous>, transform_indices = @transform_1, window_bounds = array<i64: 32, 16>}, {pipeline_mode = #tpu.pipeline_mode<synchronous>, transform_indices = @transform_2, window_bounds = array<i64: 32, 1>}, {pipeline_mode = #tpu.pipeline_mode<synchronous>, transform_indices = @transform_3, window_bounds = array<i64: 32, 32>}, {pipeline_mode = #tpu.pipeline_mode<synchronous>, transform_indices = @transform_4, window_bounds = array<i64: 32, 1>}, {pipeline_mode = #tpu.pipeline_mode<synchronous>, transform_indices = @transform_5, window_bounds = array<i64: 32, 1>}, {pipeline_mode = #tpu.pipeline_mode<synchronous>, transform_indices = @transform_6, window_bounds = array<i64: 1, 1>}, {transform_indices = @transform_7, window_bounds = array<i64: 1, 128>}]} {
    %c0 = arith.constant 0 : index
    %c0_0 = arith.constant 0 : index
    %0 = vector.load %arg2[%c0, %c0_0] : memref<32x16xf32, #tpu.memory_space<vmem>>, vector<32x16xf32>
    %c0_1 = arith.constant 0 : index
    %c0_2 = arith.constant 0 : index
    %1 = vector.load %arg3[%c0_1, %c0_2] : memref<32x1xf32, #tpu.memory_space<vmem>>, vector<32x1xf32>
    %c0_3 = arith.constant 0 : index
    %c0_4 = arith.constant 0 : index
    %2 = vector.load %arg1[%c0_3, %c0_4] : memref<128x16xf32, #tpu.memory_space<vmem>>, vector<128x16xf32>
    %cst = arith.constant dense<0.000000e+00> : vector<32x128xf32>
    %3 = tpu.matmul %0, %2, %cst {dimension_numbers = #tpu.dot_dimension_numbers<[1], [1], [0], [0], [0, 0, 1, 0], [], []>} : vector<32x16xf32>, vector<128x16xf32>, vector<32x128xf32> -> vector<32x128xf32>
    %4 = vector.broadcast %1 : vector<32x1xf32> to vector<32x128xf32>
    %5 = arith.addf %3, %4 : vector<32x128xf32>
    %cst_5 = arith.constant 0.000000e+00 : f32
    %6 = vector.broadcast %cst_5 : f32 to vector<32x128xf32>
    %7 = arith.maximumf %5, %6 : vector<32x128xf32>
    %c0_6 = arith.constant 0 : index
    %c0_7 = arith.constant 0 : index
    %8 = vector.load %arg4[%c0_6, %c0_7] : memref<32x32xf32, #tpu.memory_space<vmem>>, vector<32x32xf32>
    %cst_8 = arith.constant dense<0.000000e+00> : vector<32x128xf32>
    %9 = tpu.matmul %8, %7, %cst_8 {dimension_numbers = #tpu.dot_dimension_numbers<[1], [0], [0], [1], [0, 0, 1, 1], [], []>} : vector<32x32xf32>, vector<32x128xf32>, vector<32x128xf32> -> vector<32x128xf32>
    %c0_9 = arith.constant 0 : index
    %c0_10 = arith.constant 0 : index
    %10 = vector.load %arg5[%c0_9, %c0_10] : memref<32x1xf32, #tpu.memory_space<vmem>>, vector<32x1xf32>
    %11 = vector.broadcast %10 : vector<32x1xf32> to vector<32x128xf32>
    %12 = arith.addf %9, %11 : vector<32x128xf32>
    %cst_11 = arith.constant 0.000000e+00 : f32
    %13 = vector.broadcast %cst_11 : f32 to vector<32x128xf32>
    %14 = arith.maximumf %12, %13 : vector<32x128xf32>
    %c0_12 = arith.constant 0 : index
    %c0_13 = arith.constant 0 : index
    %15 = vector.load %arg6[%c0_12, %c0_13] : memref<32x1xf32, #tpu.memory_space<vmem>>, vector<32x1xf32>
    %c0_14 = arith.constant 0 : index
    %c0_15 = arith.constant 0 : index
    %16 = vector.load %arg7[%c0_14, %c0_15] : memref<1x1xf32, #tpu.memory_space<vmem>>, vector<1x1xf32>
    %17 = vector.broadcast %15 : vector<32x1xf32> to vector<32x128xf32>
    %18 = arith.mulf %14, %17 : vector<32x128xf32>
    %cst_16 = arith.constant dense<0.000000e+00> : vector<128xf32>
    %19 = vector.multi_reduction <add>, %18, %cst_16 [0] : vector<32x128xf32> to vector<128xf32>
    %20 = vector.shape_cast %19 : vector<128xf32> to vector<1x128xf32>
    %21 = vector.broadcast %16 : vector<1x1xf32> to vector<1x128xf32>
    %22 = arith.addf %20, %21 : vector<1x128xf32>
    %cst_17 = arith.constant 0.000000e+00 : f32
    %23 = vector.broadcast %cst_17 : f32 to vector<1x128xf32>
    %24 = arith.subf %23, %22 : vector<1x128xf32>
    %25 = math.exp %24 : vector<1x128xf32>
    %cst_18 = arith.constant 1.000000e+00 : f32
    %26 = vector.broadcast %cst_18 : f32 to vector<1x128xf32>
    %27 = arith.addf %26, %25 : vector<1x128xf32>
    %28 = tpu.reciprocal %27 : vector<1x128xf32> -> vector<1x128xf32>
    %c0_19 = arith.constant 0 : index
    %c0_20 = arith.constant 0 : index
    %29 = vector.load %arg8[%c0_19, %c0_20] : memref<1x128xf32, #tpu.memory_space<vmem>>, vector<1x128xf32>
    tpu.vector_store %arg8[%c0_19, %c0_20], %28 {strides = array<i32>} : memref<1x128xf32, #tpu.memory_space<vmem>>, vector<1x128xf32>,
    return
  }
  func.func @transform_0(%arg0: i32) -> (i32, i32) {
    %c0_i32 = arith.constant 0 : i32
    %c0_i32_0 = arith.constant 0 : i32
    return %arg0, %c0_i32 : i32, i32
  }
  func.func @transform_1(%arg0: i32) -> (i32, i32) {
    %c0_i32 = arith.constant 0 : i32
    %c0_i32_0 = arith.constant 0 : i32
    %c0_i32_1 = arith.constant 0 : i32
    return %c0_i32, %c0_i32_0 : i32, i32
  }
  func.func @transform_2(%arg0: i32) -> (i32, i32) {
    %c0_i32 = arith.constant 0 : i32
    %c0_i32_0 = arith.constant 0 : i32
    %c0_i32_1 = arith.constant 0 : i32
    return %c0_i32, %c0_i32_0 : i32, i32
  }
  func.func @transform_3(%arg0: i32) -> (i32, i32) {
    %c0_i32 = arith.constant 0 : i32
    %c0_i32_0 = arith.constant 0 : i32
    %c0_i32_1 = arith.constant 0 : i32
    return %c0_i32, %c0_i32_0 : i32, i32
  }
  func.func @transform_4(%arg0: i32) -> (i32, i32) {
    %c0_i32 = arith.constant 0 : i32
    %c0_i32_0 = arith.constant 0 : i32
    %c0_i32_1 = arith.constant 0 : i32
    return %c0_i32, %c0_i32_0 : i32, i32
  }
  func.func @transform_5(%arg0: i32) -> (i32, i32) {
    %c0_i32 = arith.constant 0 : i32
    %c0_i32_0 = arith.constant 0 : i32
    %c0_i32_1 = arith.constant 0 : i32
    return %c0_i32, %c0_i32_0 : i32, i32
  }
  func.func @transform_6(%arg0: i32) -> (i32, i32) {
    %c0_i32 = arith.constant 0 : i32
    %c0_i32_0 = arith.constant 0 : i32
    %c0_i32_1 = arith.constant 0 : i32
    return %c0_i32, %c0_i32_0 : i32, i32
  }
  func.func @transform_7(%arg0: i32) -> (i32, i32) {
    %c0_i32 = arith.constant 0 : i32
    %c0_i32_0 = arith.constant 0 : i32
    return %c0_i32, %arg0 : i32, i32
  }
}

</mosaic_0001>

<llo_original>
// kernel: tpu_custom_call.1
$region0: #{tpu_custom_call.1}
  #allocation0 [shape = 'u32[]', space=smem, size = 0x4, offset = 0x4, fixed_abs, tag = 'smem constant byte address 0x4 - core index']
  #allocation1 [shape = 'u32[72,128]{1,0:T(1,128)}', space=vmem, size = 0x9000, scoped, tag = 'internal scratch']
  #allocation2 [shape = 'f32[1,1]{1,0:T(1,128)S(1)}', space=vmem, size = 0x200, scoped, tag = 'scoped memory for tpu_custom_call.1']
  %s0 = inlined_call_operand.vmem [shape: f32[128,16], index: 0, kind: input, shape index: {}]
  %s1 = inlined_call_operand.vmem [shape: f32[32,16], index: 1, kind: input, shape index: {}]
  %s2 = inlined_call_operand.vmem [shape: f32[32,1], index: 2, kind: input, shape index: {}]
  %s3 = inlined_call_operand.vmem [shape: f32[32,32], index: 3, kind: input, shape index: {}]
  %s4 = inlined_call_operand.vmem [shape: f32[32,1], index: 4, kind: input, shape index: {}]
  %s5 = inlined_call_operand.vmem [shape: f32[32,1], index: 5, kind: input, shape index: {}]
  %s6 = inlined_call_operand.<no memory space> [shape: f32[1,1], index: 6, kind: input, shape index: {}]
  %s7 = inlined_call_operand.hbm [shape: f32[1,128], index: 7, kind: output, shape index: {}]
  %s8 = sld [smem:[#allocation0]]
  $region38: #{tpu_custom_call.1} parent=0
    _
  %s10 = ssub.s32 1, %s8
  %s11 = scalar_select 0, %s10, %s8
  %v12 = vstv %s6
  %13 = vst [vmem:[#allocation2] sm:$0x1] %v12
  $region1: #{tpu_custom_call.1} parent=0
    #allocation3 [shape = 'u8[512]{0}', space=vmem, size = 0x400, scoped, tag = 'output window, operand 0, single buffered']
    #allocation4 [shape = 's32[1]{0}', space=sflag, size = 0x4, scoped, tag = 'scoped memory for tpu_custom_call.1']
    %14 = vsyncpa [#allocation4], 0
    // Predicated region
    $region2: #{tpu_custom_call.1} parent=1 // pred_check
      _
    $region3: #{tpu_custom_call.1} parent=1 // pred_check_branch
      %16 = sbr.rel (0) target = $region5
    $region4: #{tpu_custom_call.1} parent=1 // pred_region
      _
    $region5: #{tpu_custom_call.1} parent=1 // pred_fallthru
      _
    // Predicated region
    $region6: #{tpu_custom_call.1} parent=1 // pred_check
      _
    $region7: #{tpu_custom_call.1} parent=1 // pred_check_branch
      %18 = sbr.rel (0) target = $region9
    $region8: #{tpu_custom_call.1} parent=1 // pred_region
      _
    $region9: #{tpu_custom_call.1} parent=1 // pred_fallthru
      _
    // Predicated region
    $region10: #{tpu_custom_call.1} parent=1 // pred_check
      _
    $region11: #{tpu_custom_call.1} parent=1 // pred_check_branch
      %20 = sbr.rel (0) target = $region13
    $region12: #{tpu_custom_call.1} parent=1 // pred_region
      _
    $region13: #{tpu_custom_call.1} parent=1 // pred_fallthru
      _
    // Predicated region
    $region14: #{tpu_custom_call.1} parent=1 // pred_check
      _
    $region15: #{tpu_custom_call.1} parent=1 // pred_check_branch
      %22 = sbr.rel (0) target = $region17
    $region16: #{tpu_custom_call.1} parent=1 // pred_region
      _
    $region17: #{tpu_custom_call.1} parent=1 // pred_fallthru
      _
    // Predicated region
    $region18: #{tpu_custom_call.1} parent=1 // pred_check
      _
    $region19: #{tpu_custom_call.1} parent=1 // pred_check_branch
      %24 = sbr.rel (0) target = $region21
    $region20: #{tpu_custom_call.1} parent=1 // pred_region
      _
    $region21: #{tpu_custom_call.1} parent=1 // pred_fallthru
      _
    // Predicated region
    $region22: #{tpu_custom_call.1} parent=1 // pred_check
      _
    $region23: #{tpu_custom_call.1} parent=1 // pred_check_branch
      %26 = sbr.rel (0) target = $region25
    $region24: #{tpu_custom_call.1} parent=1 // pred_region
      _
    $region25: #{tpu_custom_call.1} parent=1 // pred_fallthru
      _
    // Predicated region
    $region26: #{tpu_custom_call.1} parent=1 // pred_check
      _
    $region27: #{tpu_custom_call.1} parent=1 // pred_check_branch
      %28 = sbr.rel (0) target = $region29
    $region28: #{tpu_custom_call.1} parent=1 // pred_region
      _
    $region29: #{tpu_custom_call.1} parent=1 // pred_fallthru
      _
    %v29 = vld [vmem:[%s1] sm:$0xff]
    %v30 = vld [vmem:[%s1 + $0x8] sm:$0xff]
    %v31 = vld [vmem:[%s1 + $0x10] sm:$0xff]
    %v32 = vld [vmem:[%s1 + $0x18] sm:$0xff]
    %v33 = vld [vmem:[%s2] sm:$0xff]
    %v34 = vld [vmem:[%s2 + $0x8] sm:$0xff]
    %v35 = vld [vmem:[%s2 + $0x10] sm:$0xff]
    %v36 = vld [vmem:[%s2 + $0x18] sm:$0xff]
    %v37 = vld [vmem:[%s0] sm:$0xff]
    %v38 = vld [vmem:[%s0 + $0x8] sm:$0xff]
    %v39 = vld [vmem:[%s0 + $0x10] sm:$0xff]
    %v40 = vld [vmem:[%s0 + $0x18] sm:$0xff]
    %v41 = vld [vmem:[%s0 + $0x20] sm:$0xff]
    %v42 = vld [vmem:[%s0 + $0x28] sm:$0xff]
    %v43 = vld [vmem:[%s0 + $0x30] sm:$0xff]
    %v44 = vld [vmem:[%s0 + $0x38] sm:$0xff]
    %v45 = vld [vmem:[%s0 + $0x40] sm:$0xff]
    %v46 = vld [vmem:[%s0 + $0x48] sm:$0xff]
    %v47 = vld [vmem:[%s0 + $0x50] sm:$0xff]
    %v48 = vld [vmem:[%s0 + $0x58] sm:$0xff]
    %v49 = vld [vmem:[%s0 + $0x60] sm:$0xff]
    %v50 = vld [vmem:[%s0 + $0x68] sm:$0xff]
    %v51 = vld [vmem:[%s0 + $0x70] sm:$0xff]
    %v52 = vld [vmem:[%s0 + $0x78] sm:$0xff]
    %54 = vset.pattern.permute.xlu0 0
    %55 = vperm.xlu0 %54, %v33
    %v56 = vpop.permute.xlu0 %55
    %59 = vset.pattern.permute.xlu0 0
    %60 = vperm.xlu0 %59, %v34
    %v61 = vpop.permute.xlu0 %60
    %64 = vset.pattern.permute.xlu0 0
    %65 = vperm.xlu0 %64, %v35
    %v66 = vpop.permute.xlu0 %65
    %69 = vset.pattern.permute.xlu0 0
    %70 = vperm.xlu0 %69, %v36
    %v71 = vpop.permute.xlu0 %70
    %vm73 = vcmask 130048
    %v75 = vsel %vm73, %v29, 0
    %v78 = vsel %vm73, %v30, 0
    %v81 = vsel %vm73, %v31, 0
    %v84 = vsel %vm73, %v32, 0
    %v87 = vsel %vm73, %v37, 0
    %v90 = vsel %vm73, %v38, 0
    %v93 = vsel %vm73, %v39, 0
    %v96 = vsel %vm73, %v40, 0
    %v99 = vsel %vm73, %v41, 0
    %v102 = vsel %vm73, %v42, 0
    %v105 = vsel %vm73, %v43, 0
    %v108 = vsel %vm73, %v44, 0
    %v111 = vsel %vm73, %v45, 0
    %v114 = vsel %vm73, %v46, 0
    %v117 = vsel %vm73, %v47, 0
    %v120 = vsel %vm73, %v48, 0
    %v123 = vsel %vm73, %v49, 0
    %v126 = vsel %vm73, %v50, 0
    %v129 = vsel %vm73, %v51, 0
    %v132 = vsel %vm73, %v52, 0
    %134 = vmatpush.xpose.msra.mxu0 %v132
    %135 = vmatpush.xpose.msra.mxu0 %v129
    %136 = vmatpush.xpose.msra.mxu0 %v126
    %137 = vmatpush.xpose.msra.mxu0 %v123
    %138 = vmatpush.xpose.msra.mxu0 %v120
    %139 = vmatpush.xpose.msra.mxu0 %v117
    %140 = vmatpush.xpose.msra.mxu0 %v114
    %141 = vmatpush.xpose.msra.mxu0 %v111
    %142 = vmatpush.xpose.msra.mxu0 %v108
    %143 = vmatpush.xpose.msra.mxu0 %v105
    %144 = vmatpush.xpose.msra.mxu0 %v102
    %145 = vmatpush.xpose.msra.mxu0 %v99
    %146 = vmatpush.xpose.msra.mxu0 %v96
    %147 = vmatpush.xpose.msra.mxu0 %v93
    %148 = vmatpush.xpose.msra.mxu0 %v90
    %149 = vmatpush.xpose.msra.mxu0 %v87
    %150 = vmatmul.f32.gmra.mxu0 %v75
    %v151 = vpop.f32.mrf.mxu0
    %v152 = vadd.f32 %v56, %v151
    %153 = vmatmul.f32.gmra.mxu0 %v78
    %v154 = vpop.f32.mrf.mxu0
    %v155 = vadd.f32 %v61, %v154
    %156 = vmatmul.f32.gmra.mxu0 %v81
    %v157 = vpop.f32.mrf.mxu0
    %v158 = vadd.f32 %v66, %v157
    %159 = vmatmul.f32.gmra.mxu0 %v84
    %v160 = vpop.f32.mrf.mxu0
    %v161 = vadd.f32 %v71, %v160
    %162 = vdwg.mxu0
    %v163 = vmax.f32 %v152, 0.0
    %v164 = vmax.f32 %v155, 0.0
    %v165 = vmax.f32 %v158, 0.0
    %v166 = vmax.f32 %v161, 0.0
    %v167 = vld [vmem:[%s3] sm:$0xff]
    %v168 = vld [vmem:[%s3 + $0x8] sm:$0xff]
    %v169 = vld [vmem:[%s3 + $0x10] sm:$0xff]
    %v170 = vld [vmem:[%s3 + $0x18] sm:$0xff]
    %v171 = vld [vmem:[%s4] sm:$0xff]
    %v172 = vld [vmem:[%s4 + $0x8] sm:$0xff]
    %v173 = vld [vmem:[%s4 + $0x10] sm:$0xff]
    %v174 = vld [vmem:[%s4 + $0x18] sm:$0xff]
    %176 = vset.pattern.permute.xlu0 0
    %177 = vperm.xlu0 %176, %v171
    %v178 = vpop.permute.xlu0 %177
    %181 = vset.pattern.permute.xlu0 0
    %182 = vperm.xlu0 %181, %v172
    %v183 = vpop.permute.xlu0 %182
    %186 = vset.pattern.permute.xlu0 0
    %187 = vperm.xlu0 %186, %v173
    %v188 = vpop.permute.xlu0 %187
    %191 = vset.pattern.permute.xlu0 0
    %192 = vperm.xlu0 %191, %v174
    %v193 = vpop.permute.xlu0 %192
    %vm195 = vcmask 261120
    %v197 = vsel %vm195, %v167, 0
    %v200 = vsel %vm195, %v168, 0
    %v203 = vsel %vm195, %v169, 0
    %v206 = vsel %vm195, %v170, 0
    %208 = vmatpush.msra.mxu0 0.0
    %209 = vmatpush.msra.mxu0 0.0
    %210 = vmatpush.msra.mxu0 0.0
    %211 = vmatpush.msra.mxu0 0.0
    %212 = vmatpush.msra.mxu0 0.0
    %213 = vmatpush.msra.mxu0 0.0
    %214 = vmatpush.msra.mxu0 0.0
    %215 = vmatpush.msra.mxu0 0.0
    %216 = vmatpush.msra.mxu0 0.0
    %217 = vmatpush.msra.mxu0 0.0
    %218 = vmatpush.msra.mxu0 0.0
    %219 = vmatpush.msra.mxu0 0.0
    %220 = vmatpush.msra.mxu0 %v166
    %221 = vmatpush.msra.mxu0 %v165
    %222 = vmatpush.msra.mxu0 %v164
    %223 = vmatpush.msra.mxu0 %v163
    %224 = vmatmul.f32.gmra.mxu0 %v197
    %v225 = vpop.f32.mrf.mxu0
    %v226 = vadd.f32 %v178, %v225
    %227 = vmatmul.f32.gmra.mxu0 %v200
    %v228 = vpop.f32.mrf.mxu0
    %v229 = vadd.f32 %v183, %v228
    %230 = vmatmul.f32.gmra.mxu0 %v203
    %v231 = vpop.f32.mrf.mxu0
    %v232 = vadd.f32 %v188, %v231
    %233 = vmatmul.f32.gmra.mxu0 %v206
    %v234 = vpop.f32.mrf.mxu0
    %v235 = vadd.f32 %v193, %v234
    %236 = vdwg.mxu0
    %v237 = vmax.f32 %v226, 0.0
    %v238 = vmax.f32 %v229, 0.0
    %v239 = vmax.f32 %v232, 0.0
    %v240 = vmax.f32 %v235, 0.0
    %v241 = vld [vmem:[%s5] sm:$0xff]
    %v242 = vld [vmem:[%s5 + $0x8] sm:$0xff]
    %v243 = vld [vmem:[%s5 + $0x10] sm:$0xff]
    %v244 = vld [vmem:[%s5 + $0x18] sm:$0xff]
    %v245 = vld [vmem:[#allocation2] sm:$0x1]
    %247 = vset.pattern.permute.xlu0 0
    %248 = vperm.xlu0 %247, %v241
    %v249 = vpop.permute.xlu0 %248
    %252 = vset.pattern.permute.xlu0 0
    %253 = vperm.xlu0 %252, %v242
    %v254 = vpop.permute.xlu0 %253
    %257 = vset.pattern.permute.xlu0 0
    %258 = vperm.xlu0 %257, %v243
    %v259 = vpop.permute.xlu0 %258
    %262 = vset.pattern.permute.xlu0 0
    %263 = vperm.xlu0 %262, %v244
    %v264 = vpop.permute.xlu0 %263
    %v266 = vmul.f32 %v237, %v249
    %v267 = vmul.f32 %v238, %v254
    %v268 = vmul.f32 %v239, %v259
    %v269 = vmul.f32 %v240, %v264
    %v270 = vadd.f32 %v266, %v267
    %v271 = vadd.f32 %v270, %v268
    %v272 = vadd.f32 %v271, %v269
    %v273 = vrot.slane %v272, 4
    %v274 = vadd.f32 %v272, %v273
    %v275 = vrot.slane %v274, 2
    %v276 = vadd.f32 %v274, %v275
    %v277 = vrot.slane %v276, 1
    %v278 = vadd.f32 %v276, %v277
    %280 = vset.pattern.permute.xlu0 0
    %281 = vperm.xlu0 %280, %v245
    %v282 = vpop.permute.xlu0 %281
    %v284 = vperm.slane %v282, 0
    %v285 = vadd.f32 %v278, %v284
    %v286 = vsub.f32 0.0, %v285
    %v287 = vmul.f32 %v286, 1.442695
    %v288 = vpow.pop %v287
    %v289 = vadd.f32 %v288, 1.0
    %v290 = vrcp.pop %v289
    %v291 = vmul.f32 %v289, %v290
    %v292 = vsub.f32 1.0, %v291
    %v293 = vmul.f32 %v290, %v292
    %v294 = vadd.f32 %v290, %v293
    %vm295 = vweird.f32 %v289
    %vm296 = vweird.f32 %v290
    %vm297 = vmor %vm295, %vm296
    %v298 = vsel %vm297, %v290, %v294
    %v299 = vand.u32 2147483647, %v289
    %vm300 = vcmp.eq.f32.partialorder %v299, 8.507059e+37
    %v301 = vand.u32 %v289, 2147483648
    %v302 = vor.u32 1.1754944e-38, %v301
    %v303 = vsel %vm300, %v302, %v298
    %304 = vst [vmem:[#allocation3] sm:$0x1] %v303
    // Predicated region
    $region30: #{tpu_custom_call.1} parent=1 // pred_check
      _
    $region31: #{tpu_custom_call.1} parent=1 // pred_check_branch
      %306 = sbr.rel (0) target = $region33
    $region32: #{tpu_custom_call.1} parent=1 // pred_region
      %308 = vsyncadd [#allocation4], 0
      %s310 = sshll.u32 [#allocation3], 4
      %s311 = int_to_ptr.vmem [resolvable:$true] %s310
      %s312 = sshll.u32 %s7, 4
      %s313 = int_to_ptr.hbm [resolvable:$true] %s312
      %315 = dma.vmem_to_hbm [thread:$0]  %s311, 16, %s313, [#allocation4]
    $region33: #{tpu_custom_call.1} parent=1 // pred_fallthru
      _
    // Predicated region
    $region34: #{tpu_custom_call.1} parent=1 // pred_check
      _
    $region35: #{tpu_custom_call.1} parent=1 // pred_check_branch
      %317 = sbr.rel (0) target = $region37
    $region36: #{tpu_custom_call.1} parent=1 // pred_region
      %319 = dma.done [#allocation4], 16
    $region37: #{tpu_custom_call.1} parent=1 // pred_fallthru
      _
    %320 = vsyncpa [#allocation4], 1

</llo_original>
